<compile_context>
chip_gen: v7x
topology: tpu7x:2x2x1
jax: 0.10.0
libtpu: 0.0.40
codegen_flags: <defaults>
</compile_context>

<pallas_src>
import jax
import jax.numpy as jnp
from jax.experimental import pallas as pl
from jax.experimental.pallas import tpu as pltpu


def _round_up(x, m):
    return -(-x // m) * m


def _num_grid_steps(n_batch):
    # v7x has 2 TensorCores per chip -> split the batch two ways so both get work.
    # v5e/v6e have a single TC: a per-image grid would only add ~0.35 us/step.
    try:
        kind = jax.devices()[0].device_kind.lower()
    except Exception:
        kind = ""
    has_two_tc = ("v7" in kind) or ("7x" in kind)
    return 2 if (has_two_tc and n_batch >= 2 and n_batch % 2 == 0) else 1


@jax.jit
def conv_lrelu_2(x_nchw, weight, bias):
    """Forward pass of Conv_LReLU_2 (Conv1 + LeakyReLU(0.2)).

    x_nchw : (N, Cin, H, W)    float32
    weight : (Cout, Cin, 3, 3) float32 (PyTorch Conv2d layout)
    bias   : (Cout,)           float32
    returns: (N, Cout, H, W)   float32
    """
    N, Cin, H, W = x_nchw.shape
    Cout = weight.shape[0]
    HW = H * W

    # Sublane-pad Cin so every tap row-group is a whole 8-sublane tile.
    Cin_pad = _round_up(Cin, 8)
    K_pad = 9 * Cin_pad

    # Flat per-image padding: W+1 zeros on the left (covers the most negative tap
    # offset) and enough on the right to make each image segment a multiple of
    # 128 lanes, so batched blocks stay lane-tile aligned for any batch split.
    PADL = W + 1
    HWI = _round_up(HW + 2 * (W + 1), 128)
    PADR = HWI - HW - PADL

    n_steps = _num_grid_steps(N)
    Nb = N // n_steps            # images per grid step
    L = Nb * HW                  # lane width of patches / accumulator / output block

    # ---- host-side repacking (tiny tensors: trailing-dim pad + small transpose) ----
    x_flat = x_nchw.reshape(N, Cin, HW)
    x_flat = jnp.pad(x_flat, ((0, 0), (0, Cin_pad - Cin), (PADL, PADR)))  # (N,Cin_pad,HWI)
    x_flat = x_flat.transpose(1, 0, 2).reshape(Cin_pad, N * HWI)

    # Wmat[co, t*Cin_pad + ci] = weight[co, ci, kh, kw], t = kh*3 + kw ; bf16 for MXU.
    w_mat = jnp.pad(weight, ((0, 0), (0, Cin_pad - Cin), (0, 0), (0, 0)))
    w_mat = w_mat.transpose(0, 2, 3, 1).reshape(Cout, K_pad).astype(jnp.bfloat16)
    b2 = bias.reshape(Cout, 1).astype(jnp.float32)

    w_pow2 = (W & (W - 1)) == 0

    def kernel(x_ref, w_ref, b_ref, o_ref):
        # x_ref: (Cin_pad, Nb*HWI) f32   flat spatial, per-image zero-padded
        # w_ref: (Cout, K_pad)     bf16
        # b_ref: (Cout, 1)         f32
        # o_ref: (Cout, Nb*HW)     f32   lane-dense flat spatial
        p = jax.lax.broadcasted_iota(jnp.int32, (1, HW), 1)
        col = (p & (W - 1)) if w_pow2 else (p % W)
        not_left = col >= 1            # valid when reading dw = -1
        not_right = col <= W - 2       # valid when reading dw = +1

        taps = []
        for dh in (-1, 0, 1):
            for dw in (-1, 0, 1):
                off = PADL + dh * W + dw            # static, >= 0
                pieces = []
                for j in range(Nb):
                    base = j * HWI
                    v = x_ref[:, base + off: base + off + HW]   # (Cin_pad, HW)
                    if dw == -1:
                        v = jnp.where(not_left, v, 0.0)
                    elif dw == 1:
                        v = jnp.where(not_right, v, 0.0)
                    pieces.append(v)
                taps.append(pieces[0] if Nb == 1
                            else jnp.concatenate(pieces, axis=1))   # (Cin_pad, L)

        # (K_pad, L) im2col slab: tile-aligned concats, one cast to bf16 for the MXU.
        patches = jnp.concatenate(taps, axis=0).astype(jnp.bfloat16)

        acc = jnp.dot(w_ref[...], patches,
                      preferred_element_type=jnp.float32)          # (Cout, L)
        acc = acc + b_ref[...]                                     # bias
        acc = jnp.where(acc > 0, acc, 0.2 * acc)                   # LeakyReLU(0.2)
        o_ref[...] = acc.astype(o_ref.dtype)

    out_flat = pl.pallas_call(
        kernel,
        out_shape=jax.ShapeDtypeStruct((Cout, N * HW), x_nchw.dtype),
        grid_spec=pltpu.PrefetchScalarGridSpec(
            num_scalar_prefetch=0,
            grid=(n_steps,),
            in_specs=[
                pl.BlockSpec((Cin_pad, Nb * HWI), lambda i: (0, i)),
                pl.BlockSpec((Cout, K_pad), lambda i: (0, 0)),
                pl.BlockSpec((Cout, 1), lambda i: (0, 0)),
            ],
            out_specs=pl.BlockSpec((Cout, L), lambda i: (0, i)),
        ),
        compiler_params=pltpu.CompilerParams(
            dimension_semantics=("parallel",),
            vmem_limit_bytes=32 * 1024 * 1024,
        ),
    )(x_flat, w_mat, b2)

    # (Cout, N*HW) -> (N, Cout, H, W): tiny reshape + transpose handled by XLA.
    return out_flat.reshape(Cout, N, H, W).transpose(1, 0, 2, 3)


def _reference(x_nchw, weight, bias):
    y = jax.lax.conv_general_dilated(
        x_nchw, weight, window_strides=(1, 1), padding=((1, 1), (1, 1)),
        dimension_numbers=("NCHW", "OIHW", "NCHW"))
    y = y + bias.reshape(1, -1, 1, 1)
    return jnp.where(y > 0, y, 0.2 * y)


if __name__ == "__main__":
    key = jax.random.PRNGKey(0)
    kx, kw, kb = jax.random.split(key, 3)

    N, Cin, Cout, H, W = 2, 4, 8, 16, 16
    x = jax.random.normal(kx, (N, Cin, H, W), dtype=jnp.float32)
    # Deterministic "Conv1" parameters (kaiming-uniform-ish scale).
    fan_in = Cin * 3 * 3
    bound = 1.0 / (fan_in ** 0.5)
    weight = jax.random.uniform(kw, (Cout, Cin, 3, 3),
                                minval=-bound, maxval=bound, dtype=jnp.float32)
    bias = jax.random.uniform(kb, (Cout,),
                              minval=-bound, maxval=bound, dtype=jnp.float32)

    out = jax.block_until_ready(conv_lrelu_2(x, weight, bias))

    ref = _reference(x, weight, bias)
    assert out.shape == (N, Cout, H, W)
    # bf16 MXU operands with f32 accumulation -> loosen tolerance vs f32 reference.
    assert jnp.allclose(out, ref, rtol=2e-2, atol=2e-2), "mismatch vs reference"

    print("KERNEL_OK")
</pallas_src>

<mosaic_0001>
module attributes {stable_mosaic.version = 11 : i64} {
  func.func @kernel(%arg0: i32, %arg1: memref<8x768xf32, #tpu.memory_space<vmem>>, %arg2: memref<8x72xbf16, #tpu.memory_space<vmem>>, %arg3: memref<8x1xf32, #tpu.memory_space<vmem>>, %arg4: memref<8x512xf32, #tpu.memory_space<vmem>>) attributes {dimension_semantics = [#tpu.dimension_semantics<parallel>], iteration_bounds = array<i64: 1>, scalar_prefetch = 0 : i64, scratch_operands = 0 : i64, tpu.core_type = #tpu.core_type<tc>, window_params = [{transform_indices = @transform_0, window_bounds = array<i64: 8, 768>}, {pipeline_mode = #tpu.pipeline_mode<synchronous>, transform_indices = @transform_1, window_bounds = array<i64: 8, 72>}, {pipeline_mode = #tpu.pipeline_mode<synchronous>, transform_indices = @transform_2, window_bounds = array<i64: 8, 1>}, {transform_indices = @transform_3, window_bounds = array<i64: 8, 512>}]} {
    %0 = tpu.iota {dimensions = array<i32: 1>} : vector<1x256xi32>
    %c15_i32 = arith.constant 15 : i32
    %1 = vector.broadcast %c15_i32 : i32 to vector<1x256xi32>
    %2 = arith.andi %0, %1 : vector<1x256xi32>
    %c1_i32 = arith.constant 1 : i32
    %3 = vector.broadcast %c1_i32 : i32 to vector<1x256xi32>
    %4 = arith.cmpi sge, %2, %3 : vector<1x256xi32>
    %c14_i32 = arith.constant 14 : i32
    %5 = vector.broadcast %c14_i32 : i32 to vector<1x256xi32>
    %6 = arith.cmpi sle, %2, %5 : vector<1x256xi32>
    %c0 = arith.constant 0 : index
    %c0_0 = arith.constant 0 : index
    %7 = vector.load %arg1[%c0, %c0_0] : memref<8x768xf32, #tpu.memory_space<vmem>>, vector<8x256xf32>
    %cst = arith.constant 0.000000e+00 : f32
    %8 = vector.shape_cast %4 : vector<1x256xi1> to vector<1x256xi1>
    %9 = vector.broadcast %8 : vector<1x256xi1> to vector<8x256xi1>
    %10 = vector.broadcast %cst : f32 to vector<8x256xf32>
    %11 = arith.select %9, %7, %10 : vector<8x256xi1>, vector<8x256xf32>
    %c0_1 = arith.constant 0 : index
    %c384 = arith.constant 384 : index
    %12 = vector.load %arg1[%c0_1, %c384] : memref<8x768xf32, #tpu.memory_space<vmem>>, vector<8x256xf32>
    %cst_2 = arith.constant 0.000000e+00 : f32
    %13 = vector.shape_cast %4 : vector<1x256xi1> to vector<1x256xi1>
    %14 = vector.broadcast %13 : vector<1x256xi1> to vector<8x256xi1>
    %15 = vector.broadcast %cst_2 : f32 to vector<8x256xf32>
    %16 = arith.select %14, %12, %15 : vector<8x256xi1>, vector<8x256xf32>
    %17 = tpu.concatenate %11, %16 in 1 : vector<8x256xf32>, vector<8x256xf32> -> vector<8x512xf32>
    %c0_3 = arith.constant 0 : index
    %c1 = arith.constant 1 : index
    %18 = vector.load %arg1[%c0_3, %c1] : memref<8x768xf32, #tpu.memory_space<vmem>>, vector<8x256xf32>
    %c0_4 = arith.constant 0 : index
    %c385 = arith.constant 385 : index
    %19 = vector.load %arg1[%c0_4, %c385] : memref<8x768xf32, #tpu.memory_space<vmem>>, vector<8x256xf32>
    %20 = tpu.concatenate %18, %19 in 1 : vector<8x256xf32>, vector<8x256xf32> -> vector<8x512xf32>
    %c0_5 = arith.constant 0 : index
    %c2 = arith.constant 2 : index
    %21 = vector.load %arg1[%c0_5, %c2] : memref<8x768xf32, #tpu.memory_space<vmem>>, vector<8x256xf32>
    %cst_6 = arith.constant 0.000000e+00 : f32
    %22 = vector.shape_cast %6 : vector<1x256xi1> to vector<1x256xi1>
    %23 = vector.broadcast %22 : vector<1x256xi1> to vector<8x256xi1>
    %24 = vector.broadcast %cst_6 : f32 to vector<8x256xf32>
    %25 = arith.select %23, %21, %24 : vector<8x256xi1>, vector<8x256xf32>
    %c0_7 = arith.constant 0 : index
    %c386 = arith.constant 386 : index
    %26 = vector.load %arg1[%c0_7, %c386] : memref<8x768xf32, #tpu.memory_space<vmem>>, vector<8x256xf32>
    %cst_8 = arith.constant 0.000000e+00 : f32
    %27 = vector.shape_cast %6 : vector<1x256xi1> to vector<1x256xi1>
    %28 = vector.broadcast %27 : vector<1x256xi1> to vector<8x256xi1>
    %29 = vector.broadcast %cst_8 : f32 to vector<8x256xf32>
    %30 = arith.select %28, %26, %29 : vector<8x256xi1>, vector<8x256xf32>
    %31 = tpu.concatenate %25, %30 in 1 : vector<8x256xf32>, vector<8x256xf32> -> vector<8x512xf32>
    %c0_9 = arith.constant 0 : index
    %c16 = arith.constant 16 : index
    %32 = vector.load %arg1[%c0_9, %c16] : memref<8x768xf32, #tpu.memory_space<vmem>>, vector<8x256xf32>
    %cst_10 = arith.constant 0.000000e+00 : f32
    %33 = vector.shape_cast %4 : vector<1x256xi1> to vector<1x256xi1>
    %34 = vector.broadcast %33 : vector<1x256xi1> to vector<8x256xi1>
    %35 = vector.broadcast %cst_10 : f32 to vector<8x256xf32>
    %36 = arith.select %34, %32, %35 : vector<8x256xi1>, vector<8x256xf32>
    %c0_11 = arith.constant 0 : index
    %c400 = arith.constant 400 : index
    %37 = vector.load %arg1[%c0_11, %c400] : memref<8x768xf32, #tpu.memory_space<vmem>>, vector<8x256xf32>
    %cst_12 = arith.constant 0.000000e+00 : f32
    %38 = vector.shape_cast %4 : vector<1x256xi1> to vector<1x256xi1>
    %39 = vector.broadcast %38 : vector<1x256xi1> to vector<8x256xi1>
    %40 = vector.broadcast %cst_12 : f32 to vector<8x256xf32>
    %41 = arith.select %39, %37, %40 : vector<8x256xi1>, vector<8x256xf32>
    %42 = tpu.concatenate %36, %41 in 1 : vector<8x256xf32>, vector<8x256xf32> -> vector<8x512xf32>
    %c0_13 = arith.constant 0 : index
    %c17 = arith.constant 17 : index
    %43 = vector.load %arg1[%c0_13, %c17] : memref<8x768xf32, #tpu.memory_space<vmem>>, vector<8x256xf32>
    %c0_14 = arith.constant 0 : index
    %c401 = arith.constant 401 : index
    %44 = vector.load %arg1[%c0_14, %c401] : memref<8x768xf32, #tpu.memory_space<vmem>>, vector<8x256xf32>
    %45 = tpu.concatenate %43, %44 in 1 : vector<8x256xf32>, vector<8x256xf32> -> vector<8x512xf32>
    %c0_15 = arith.constant 0 : index
    %c18 = arith.constant 18 : index
    %46 = vector.load %arg1[%c0_15, %c18] : memref<8x768xf32, #tpu.memory_space<vmem>>, vector<8x256xf32>
    %cst_16 = arith.constant 0.000000e+00 : f32
    %47 = vector.shape_cast %6 : vector<1x256xi1> to vector<1x256xi1>
    %48 = vector.broadcast %47 : vector<1x256xi1> to vector<8x256xi1>
    %49 = vector.broadcast %cst_16 : f32 to vector<8x256xf32>
    %50 = arith.select %48, %46, %49 : vector<8x256xi1>, vector<8x256xf32>
    %c0_17 = arith.constant 0 : index
    %c402 = arith.constant 402 : index
    %51 = vector.load %arg1[%c0_17, %c402] : memref<8x768xf32, #tpu.memory_space<vmem>>, vector<8x256xf32>
    %cst_18 = arith.constant 0.000000e+00 : f32
    %52 = vector.shape_cast %6 : vector<1x256xi1> to vector<1x256xi1>
    %53 = vector.broadcast %52 : vector<1x256xi1> to vector<8x256xi1>
    %54 = vector.broadcast %cst_18 : f32 to vector<8x256xf32>
    %55 = arith.select %53, %51, %54 : vector<8x256xi1>, vector<8x256xf32>
    %56 = tpu.concatenate %50, %55 in 1 : vector<8x256xf32>, vector<8x256xf32> -> vector<8x512xf32>
    %c0_19 = arith.constant 0 : index
    %c32 = arith.constant 32 : index
    %57 = vector.load %arg1[%c0_19, %c32] : memref<8x768xf32, #tpu.memory_space<vmem>>, vector<8x256xf32>
    %cst_20 = arith.constant 0.000000e+00 : f32
    %58 = vector.shape_cast %4 : vector<1x256xi1> to vector<1x256xi1>
    %59 = vector.broadcast %58 : vector<1x256xi1> to vector<8x256xi1>
    %60 = vector.broadcast %cst_20 : f32 to vector<8x256xf32>
    %61 = arith.select %59, %57, %60 : vector<8x256xi1>, vector<8x256xf32>
    %c0_21 = arith.constant 0 : index
    %c416 = arith.constant 416 : index
    %62 = vector.load %arg1[%c0_21, %c416] : memref<8x768xf32, #tpu.memory_space<vmem>>, vector<8x256xf32>
    %cst_22 = arith.constant 0.000000e+00 : f32
    %63 = vector.shape_cast %4 : vector<1x256xi1> to vector<1x256xi1>
    %64 = vector.broadcast %63 : vector<1x256xi1> to vector<8x256xi1>
    %65 = vector.broadcast %cst_22 : f32 to vector<8x256xf32>
    %66 = arith.select %64, %62, %65 : vector<8x256xi1>, vector<8x256xf32>
    %67 = tpu.concatenate %61, %66 in 1 : vector<8x256xf32>, vector<8x256xf32> -> vector<8x512xf32>
    %c0_23 = arith.constant 0 : index
    %c33 = arith.constant 33 : index
    %68 = vector.load %arg1[%c0_23, %c33] : memref<8x768xf32, #tpu.memory_space<vmem>>, vector<8x256xf32>
    %c0_24 = arith.constant 0 : index
    %c417 = arith.constant 417 : index
    %69 = vector.load %arg1[%c0_24, %c417] : memref<8x768xf32, #tpu.memory_space<vmem>>, vector<8x256xf32>
    %70 = tpu.concatenate %68, %69 in 1 : vector<8x256xf32>, vector<8x256xf32> -> vector<8x512xf32>
    %c0_25 = arith.constant 0 : index
    %c34 = arith.constant 34 : index
    %71 = vector.load %arg1[%c0_25, %c34] : memref<8x768xf32, #tpu.memory_space<vmem>>, vector<8x256xf32>
    %cst_26 = arith.constant 0.000000e+00 : f32
    %72 = vector.shape_cast %6 : vector<1x256xi1> to vector<1x256xi1>
    %73 = vector.broadcast %72 : vector<1x256xi1> to vector<8x256xi1>
    %74 = vector.broadcast %cst_26 : f32 to vector<8x256xf32>
    %75 = arith.select %73, %71, %74 : vector<8x256xi1>, vector<8x256xf32>
    %c0_27 = arith.constant 0 : index
    %c418 = arith.constant 418 : index
    %76 = vector.load %arg1[%c0_27, %c418] : memref<8x768xf32, #tpu.memory_space<vmem>>, vector<8x256xf32>
    %cst_28 = arith.constant 0.000000e+00 : f32
    %77 = vector.shape_cast %6 : vector<1x256xi1> to vector<1x256xi1>
    %78 = vector.broadcast %77 : vector<1x256xi1> to vector<8x256xi1>
    %79 = vector.broadcast %cst_28 : f32 to vector<8x256xf32>
    %80 = arith.select %78, %76, %79 : vector<8x256xi1>, vector<8x256xf32>
    %81 = tpu.concatenate %75, %80 in 1 : vector<8x256xf32>, vector<8x256xf32> -> vector<8x512xf32>
    %82 = tpu.concatenate %17, %20, %31, %42, %45, %56, %67, %70, %81 in 0 : vector<8x512xf32>, vector<8x512xf32>, vector<8x512xf32>, vector<8x512xf32>, vector<8x512xf32>, vector<8x512xf32>, vector<8x512xf32>, vector<8x512xf32>, vector<8x512xf32> -> vector<72x512xf32>
    %83 = arith.truncf %82 : vector<72x512xf32> to vector<72x512xbf16>
    %c0_29 = arith.constant 0 : index
    %c0_30 = arith.constant 0 : index
    %84 = vector.load %arg2[%c0_29, %c0_30] : memref<8x72xbf16, #tpu.memory_space<vmem>>, vector<8x72xbf16>
    %cst_31 = arith.constant dense<0.000000e+00> : vector<8x512xf32>
    %85 = tpu.matmul %84, %83, %cst_31 {dimension_numbers = #tpu.dot_dimension_numbers<[1], [0], [0], [1], [0, 0, 1, 1], [], []>} : vector<8x72xbf16>, vector<72x512xbf16>, vector<8x512xf32> -> vector<8x512xf32>
    %c0_32 = arith.constant 0 : index
    %c0_33 = arith.constant 0 : index
    %86 = vector.load %arg3[%c0_32, %c0_33] : memref<8x1xf32, #tpu.memory_space<vmem>>, vector<8x1xf32>
    %87 = vector.broadcast %86 : vector<8x1xf32> to vector<8x512xf32>
    %88 = arith.addf %85, %87 : vector<8x512xf32>
    %cst_34 = arith.constant 0.000000e+00 : f32
    %89 = vector.broadcast %cst_34 : f32 to vector<8x512xf32>
    %90 = arith.cmpf ogt, %88, %89 : vector<8x512xf32>
    %cst_35 = arith.constant 2.000000e-01 : f32
    %91 = vector.broadcast %cst_35 : f32 to vector<8x512xf32>
    %92 = arith.mulf %91, %88 : vector<8x512xf32>
    %93 = arith.select %90, %88, %92 : vector<8x512xi1>, vector<8x512xf32>
    %c0_36 = arith.constant 0 : index
    %c0_37 = arith.constant 0 : index
    %94 = vector.load %arg4[%c0_36, %c0_37] : memref<8x512xf32, #tpu.memory_space<vmem>>, vector<8x512xf32>
    tpu.vector_store %arg4[%c0_36, %c0_37], %93 {strides = array<i32>} : memref<8x512xf32, #tpu.memory_space<vmem>>, vector<8x512xf32>,
    return
  }
  func.func @transform_0(%arg0: i32) -> (i32, i32) {
    %c0_i32 = arith.constant 0 : i32
    %c0_i32_0 = arith.constant 0 : i32
    return %c0_i32, %arg0 : i32, i32
  }
  func.func @transform_1(%arg0: i32) -> (i32, i32) {
    %c0_i32 = arith.constant 0 : i32
    %c0_i32_0 = arith.constant 0 : i32
    %c0_i32_1 = arith.constant 0 : i32
    return %c0_i32, %c0_i32_0 : i32, i32
  }
  func.func @transform_2(%arg0: i32) -> (i32, i32) {
    %c0_i32 = arith.constant 0 : i32
    %c0_i32_0 = arith.constant 0 : i32
    %c0_i32_1 = arith.constant 0 : i32
    return %c0_i32, %c0_i32_0 : i32, i32
  }
  func.func @transform_3(%arg0: i32) -> (i32, i32) {
    %c0_i32 = arith.constant 0 : i32
    %c0_i32_0 = arith.constant 0 : i32
    return %c0_i32, %arg0 : i32, i32
  }
}

</mosaic_0001>

<llo_original>
// kernel: conv_lrelu_2.1
$region0: #{conv_lrelu_2.1}
  #allocation0 [shape = 'u32[]', space=smem, size = 0x4, offset = 0x4, fixed_abs, tag = 'smem constant byte address 0x4 - core index']
  #allocation1 [shape = 'u32[144,128]{1,0:T(1,128)}', space=vmem, size = 0x12000, scoped, tag = 'internal scratch']
  %s0 = inlined_call_operand.vmem [shape: f32[8,768], index: 0, kind: input, shape index: {}]
  %s1 = inlined_call_operand.vmem [shape: bf16[8,72], index: 1, kind: input, shape index: {}]
  %s2 = inlined_call_operand.vmem [shape: f32[8,1], index: 2, kind: input, shape index: {}]
  %s3 = inlined_call_operand.vmem [shape: f32[8,512], index: 3, kind: output, shape index: {}]
  %s4 = sld [smem:[#allocation0]]
  $region22: #{conv_lrelu_2.1} parent=0
    _
  %s6 = ssub.s32 1, %s4
  %s7 = scalar_select 0, %s6, %s4
  // Predicated region
  $region2: #{conv_lrelu_2.1} parent=0 // pred_check
    _
  $region3: #{conv_lrelu_2.1} parent=0 // pred_check_branch
    %9 = sbr.rel (0) target = $region5
  $region4: #{conv_lrelu_2.1} parent=0 // pred_region
    _
  $region5: #{conv_lrelu_2.1} parent=0 // pred_fallthru
    _
  // Predicated region
  $region6: #{conv_lrelu_2.1} parent=0 // pred_check
    _
  $region7: #{conv_lrelu_2.1} parent=0 // pred_check_branch
    %11 = sbr.rel (0) target = $region9
  $region8: #{conv_lrelu_2.1} parent=0 // pred_region
    _
  $region9: #{conv_lrelu_2.1} parent=0 // pred_fallthru
    _
  // Predicated region
  $region10: #{conv_lrelu_2.1} parent=0 // pred_check
    _
  $region11: #{conv_lrelu_2.1} parent=0 // pred_check_branch
    %13 = sbr.rel (0) target = $region13
  $region12: #{conv_lrelu_2.1} parent=0 // pred_region
    _
  $region13: #{conv_lrelu_2.1} parent=0 // pred_fallthru
    _
  %v15 = vlaneseq
  %v16 = vand.u32 %v15, 127
  %v17 = vadd.s32 %v16, 128
  %v18 = vand.u32 %v16, 15
  %v19 = vand.u32 %v17, 15
  %vm20 = vcmp.ge.s32.totalorder %v18, 1
  %vm21 = vcmp.ge.s32.totalorder %v19, 1
  %vm22 = vcmp.le.s32.totalorder %v18, 14
  %vm23 = vcmp.le.s32.totalorder %v19, 14
  %v24 = vld [vmem:[%s0] sm:$0xff]
  %v25 = vld [vmem:[%s0 + $0x8] sm:$0xff]
  %v26 = vsel %vm20, 1, 0
  %v27 = vsel %vm21, 1, 0
  %vm28 = vcmp.eq.s32.totalorder %v26, 1
  %vm29 = vcmp.eq.s32.totalorder %v27, 1
  %v30 = vsel %vm28, %v24, 0.0
  %v31 = vsel %vm29, %v25, 0.0
  %v32 = vld [vmem:[%s0 + $0x18] sm:$0xff]
  %v33 = vld [vmem:[%s0 + $0x20] sm:$0xff]
  %v34 = vsel %vm28, %v32, 0.0
  %v35 = vsel %vm29, %v33, 0.0
  %v36 = vld [vmem:[%s0 + $0x10] sm:$0xff]
  %v37 = vld [vmem:[%s0 + $0x18] sm:$0xff]
  %v38 = vld [vmem:[%s0 + $0x20] sm:$0xff]
  %v39 = vld [vmem:[%s0 + $0x28] sm:$0xff]
  %43 = vrot.lane.b32.xlu0 %v24, 127
  %v44 = vpop.permute.xlu0 %43
  %45 = vrot.lane.b32.xlu0 %v25, 127
  %v46 = vpop.permute.xlu0 %45
  %47 = vrot.lane.b32.xlu0 %v36, 127
  %v48 = vpop.permute.xlu0 %47
  %vm49 = vcmask 1039360
  %v50 = vsel %vm49, %v44, %v46
  %v51 = vsel %vm49, %v46, %v48
  %57 = vrot.lane.b32.xlu0 %v37, 127
  %v58 = vpop.permute.xlu0 %57
  %59 = vrot.lane.b32.xlu0 %v38, 127
  %v60 = vpop.permute.xlu0 %59
  %61 = vrot.lane.b32.xlu0 %v39, 127
  %v62 = vpop.permute.xlu0 %61
  %v63 = vsel %vm49, %v58, %v60
  %v64 = vsel %vm49, %v60, %v62
  %v67 = vsel %vm22, 1, 0
  %v68 = vsel %vm23, 1, 0
  %vm69 = vcmp.eq.s32.totalorder %v67, 1
  %vm70 = vcmp.eq.s32.totalorder %v68, 1
  %71 = vrot.lane.b32.xlu0 %v24, 126
  %v72 = vpop.permute.xlu0 %71
  %73 = vrot.lane.b32.xlu0 %v25, 126
  %v74 = vpop.permute.xlu0 %73
  %75 = vrot.lane.b32.xlu0 %v36, 126
  %v76 = vpop.permute.xlu0 %75
  %vm77 = vcmask 1031168
  %v78 = vsel %vm77, %v72, %v74
  %v79 = vsel %vm77, %v74, %v76
  %v82 = vsel %vm69, %v78, 0.0
  %v83 = vsel %vm70, %v79, 0.0
  %84 = vrot.lane.b32.xlu0 %v37, 126
  %v85 = vpop.permute.xlu0 %84
  %86 = vrot.lane.b32.xlu0 %v38, 126
  %v87 = vpop.permute.xlu0 %86
  %88 = vrot.lane.b32.xlu0 %v39, 126
  %v89 = vpop.permute.xlu0 %88
  %v90 = vsel %vm77, %v85, %v87
  %v91 = vsel %vm77, %v87, %v89
  %v94 = vsel %vm69, %v90, 0.0
  %v95 = vsel %vm70, %v91, 0.0
  %96 = vrot.lane.b32.xlu0 %v24, 112
  %v97 = vpop.permute.xlu0 %96
  %98 = vrot.lane.b32.xlu0 %v25, 112
  %v99 = vpop.permute.xlu0 %98
  %100 = vrot.lane.b32.xlu0 %v36, 112
  %v101 = vpop.permute.xlu0 %100
  %vm102 = vcmask 916480
  %v103 = vsel %vm102, %v97, %v99
  %v104 = vsel %vm102, %v99, %v101
  %v107 = vsel %vm28, %v103, 0.0
  %v108 = vsel %vm29, %v104, 0.0
  %109 = vrot.lane.b32.xlu0 %v37, 112
  %v110 = vpop.permute.xlu0 %109
  %111 = vrot.lane.b32.xlu0 %v38, 112
  %v112 = vpop.permute.xlu0 %111
  %113 = vrot.lane.b32.xlu0 %v39, 112
  %v114 = vpop.permute.xlu0 %113
  %v115 = vsel %vm102, %v110, %v112
  %v116 = vsel %vm102, %v112, %v114
  %v119 = vsel %vm28, %v115, 0.0
  %v120 = vsel %vm29, %v116, 0.0
  %121 = vrot.lane.b32.xlu0 %v24, 111
  %v122 = vpop.permute.xlu0 %121
  %123 = vrot.lane.b32.xlu0 %v25, 111
  %v124 = vpop.permute.xlu0 %123
  %125 = vrot.lane.b32.xlu0 %v36, 111
  %v126 = vpop.permute.xlu0 %125
  %vm127 = vcmask 908288
  %v128 = vsel %vm127, %v122, %v124
  %v129 = vsel %vm127, %v124, %v126
  %132 = vrot.lane.b32.xlu0 %v37, 111
  %v133 = vpop.permute.xlu0 %132
  %134 = vrot.lane.b32.xlu0 %v38, 111
  %v135 = vpop.permute.xlu0 %134
  %136 = vrot.lane.b32.xlu0 %v39, 111
  %v137 = vpop.permute.xlu0 %136
  %v138 = vsel %vm127, %v133, %v135
  %v139 = vsel %vm127, %v135, %v137
  %142 = vrot.lane.b32.xlu0 %v24, 110
  %v143 = vpop.permute.xlu0 %142
  %144 = vrot.lane.b32.xlu0 %v25, 110
  %v145 = vpop.permute.xlu0 %144
  %146 = vrot.lane.b32.xlu0 %v36, 110
  %v147 = vpop.permute.xlu0 %146
  %vm148 = vcmask 900096
  %v149 = vsel %vm148, %v143, %v145
  %v150 = vsel %vm148, %v145, %v147
  %v153 = vsel %vm69, %v149, 0.0
  %v154 = vsel %vm70, %v150, 0.0
  %155 = vrot.lane.b32.xlu0 %v37, 110
  %v156 = vpop.permute.xlu0 %155
  %157 = vrot.lane.b32.xlu0 %v38, 110
  %v158 = vpop.permute.xlu0 %157
  %159 = vrot.lane.b32.xlu0 %v39, 110
  %v160 = vpop.permute.xlu0 %159
  %v161 = vsel %vm148, %v156, %v158
  %v162 = vsel %vm148, %v158, %v160
  %v165 = vsel %vm69, %v161, 0.0
  %v166 = vsel %vm70, %v162, 0.0
  %167 = vrot.lane.b32.xlu0 %v24, 96
  %v168 = vpop.permute.xlu0 %167
  %169 = vrot.lane.b32.xlu0 %v25, 96
  %v170 = vpop.permute.xlu0 %169
  %171 = vrot.lane.b32.xlu0 %v36, 96
  %v172 = vpop.permute.xlu0 %171
  %vm173 = vcmask 785408
  %v174 = vsel %vm173, %v168, %v170
  %v175 = vsel %vm173, %v170, %v172
  %v178 = vsel %vm28, %v174, 0.0
  %v179 = vsel %vm29, %v175, 0.0
  %180 = vrot.lane.b32.xlu0 %v37, 96
  %v181 = vpop.permute.xlu0 %180
  %182 = vrot.lane.b32.xlu0 %v38, 96
  %v183 = vpop.permute.xlu0 %182
  %184 = vrot.lane.b32.xlu0 %v39, 96
  %v185 = vpop.permute.xlu0 %184
  %v186 = vsel %vm173, %v181, %v183
  %v187 = vsel %vm173, %v183, %v185
  %v190 = vsel %vm28, %v186, 0.0
  %v191 = vsel %vm29, %v187, 0.0
  %192 = vrot.lane.b32.xlu0 %v24, 95
  %v193 = vpop.permute.xlu0 %192
  %194 = vrot.lane.b32.xlu0 %v25, 95
  %v195 = vpop.permute.xlu0 %194
  %196 = vrot.lane.b32.xlu0 %v36, 95
  %v197 = vpop.permute.xlu0 %196
  %vm198 = vcmask 777216
  %v199 = vsel %vm198, %v193, %v195
  %v200 = vsel %vm198, %v195, %v197
  %203 = vrot.lane.b32.xlu0 %v37, 95
  %v204 = vpop.permute.xlu0 %203
  %205 = vrot.lane.b32.xlu0 %v38, 95
  %v206 = vpop.permute.xlu0 %205
  %207 = vrot.lane.b32.xlu0 %v39, 95
  %v208 = vpop.permute.xlu0 %207
  %v209 = vsel %vm198, %v204, %v206
  %v210 = vsel %vm198, %v206, %v208
  %213 = vrot.lane.b32.xlu0 %v24, 94
  %v214 = vpop.permute.xlu0 %213
  %215 = vrot.lane.b32.xlu0 %v25, 94
  %v216 = vpop.permute.xlu0 %215
  %217 = vrot.lane.b32.xlu0 %v36, 94
  %v218 = vpop.permute.xlu0 %217
  %vm219 = vcmask 769024
  %v220 = vsel %vm219, %v214, %v216
  %v221 = vsel %vm219, %v216, %v218
  %v224 = vsel %vm69, %v220, 0.0
  %v225 = vsel %vm70, %v221, 0.0
  %226 = vrot.lane.b32.xlu0 %v37, 94
  %v227 = vpop.permute.xlu0 %226
  %228 = vrot.lane.b32.xlu0 %v38, 94
  %v229 = vpop.permute.xlu0 %228
  %230 = vrot.lane.b32.xlu0 %v39, 94
  %v231 = vpop.permute.xlu0 %230
  %v232 = vsel %vm219, %v227, %v229
  %v233 = vsel %vm219, %v229, %v231
  %v236 = vsel %vm69, %v232, 0.0
  %v237 = vsel %vm70, %v233, 0.0
  %v238 = vpack.c.bf16 %v50, %v30
  %v239 = vpack.c.bf16 %v51, %v31
  %v240 = vpack.c.bf16 %v63, %v34
  %v241 = vpack.c.bf16 %v64, %v35
  %v242 = vpack.c.bf16 %v107, %v82
  %v243 = vpack.c.bf16 %v108, %v83
  %v244 = vpack.c.bf16 %v119, %v94
  %v245 = vpack.c.bf16 %v120, %v95
  %v246 = vpack.c.bf16 %v153, %v128
  %v247 = vpack.c.bf16 %v154, %v129
  %v248 = vpack.c.bf16 %v165, %v138
  %v249 = vpack.c.bf16 %v166, %v139
  %v250 = vpack.c.bf16 %v199, %v178
  %v251 = vpack.c.bf16 %v200, %v179
  %v252 = vpack.c.bf16 %v209, %v190
  %v253 = vpack.c.bf16 %v210, %v191
  %v254 = vpack.c.bf16 %v224, %v224
  %v255 = vpack.c.bf16 %v225, %v225
  %v256 = vpack.c.bf16 %v236, %v236
  %v257 = vpack.c.bf16 %v237, %v237
  %v258 = vld [vmem:[%s1] sm:$0xf]
  %v259 = vld [vmem:[%s2] sm:$0xff]
  %261 = vset.pattern.permute.xlu0 0
  %262 = vperm.xlu0 %261, %v259
  %v263 = vpop.permute.xlu0 %262
  %vm265 = vcmask 588800
  %v267 = vsel %vm265, %v258, 0
  %vm269 = vcmask 1043456
  %v271 = vsel %vm269, %v254, 0
  %v274 = vsel %vm269, %v255, 0
  %v277 = vsel %vm269, %v256, 0
  %v280 = vsel %vm269, %v257, 0
  %282 = vmatprep.subr.bf16.mxu0 %v239
  %283 = vmatpush1.bf16.msra.mxu0 %v238
  %284 = vmatprep.subr.bf16.mxu0 %v243
  %285 = vmatpush1.bf16.msra.mxu0 %v242
  %286 = vmatprep.subr.bf16.mxu0 %v247
  %287 = vmatpush1.bf16.msra.mxu0 %v246
  %288 = vmatprep.subr.bf16.mxu0 %v251
  %289 = vmatpush1.bf16.msra.mxu0 %v250
  %290 = vmatprep.subr.bf16.mxu0 %v274
  %291 = vmatpush1.bf16.msra.mxu0 %v271
  %292 = vmatprep.subr.bf16.mxu0 0
  %293 = vmatpush1.bf16.msra.mxu0 0
  %294 = vmatprep.subr.bf16.mxu0 0
  %295 = vmatpush1.bf16.msra.mxu0 0
  %296 = vmatprep.subr.bf16.mxu0 0
  %297 = vmatpush1.bf16.msra.mxu0 0
  %298 = vmatprep.subr.bf16.mxu0 0
  %299 = vmatpush1.bf16.msra.mxu0 0
  %300 = vmatprep.subr.bf16.mxu0 0
  %301 = vmatpush1.bf16.msra.mxu0 0
  %302 = vmatprep.subr.bf16.mxu0 0
  %303 = vmatpush1.bf16.msra.mxu0 0
  %304 = vmatprep.subr.bf16.mxu0 0
  %305 = vmatpush1.bf16.msra.mxu0 0
  %306 = vmatprep.subr.bf16.mxu0 0
  %307 = vmatpush1.bf16.msra.mxu0 0
  %308 = vmatprep.subr.bf16.mxu0 0
  %309 = vmatpush1.bf16.msra.mxu0 0
  %310 = vmatprep.subr.bf16.mxu0 0
  %311 = vmatpush1.bf16.msra.mxu0 0
  %312 = vmatprep.subr.bf16.mxu0 0
  %313 = vmatpush1.bf16.msra.mxu0 0
  %314 = vmatprep.mubr.bf16.mxu0 0
  %315 = vmatmul.mubr.bf16.gmra.mrb[0].mxu0 %v267
  %v316 = vpop.f32.mrb[0].mxu0
  %v317 = vadd.f32 %v263, %v316
  %v318 = vpop.f32.mrb[0].mxu0
  %v319 = vadd.f32 %v263, %v318
  %v320 = vpop.f32.mrb[0].mxu0
  %v321 = vpop.f32.mrb[0].mxu0
  %322 = vdwg.mxu0
  %323 = vmatprep.subr.bf16.mxu0 %v241
  %324 = vmatpush1.bf16.msra.mxu0 %v240
  %325 = vmatprep.subr.bf16.mxu0 %v245
  %326 = vmatpush1.bf16.msra.mxu0 %v244
  %327 = vmatprep.subr.bf16.mxu0 %v249
  %328 = vmatpush1.bf16.msra.mxu0 %v248
  %329 = vmatprep.subr.bf16.mxu0 %v253
  %330 = vmatpush1.bf16.msra.mxu0 %v252
  %331 = vmatprep.subr.bf16.mxu0 %v280
  %332 = vmatpush1.bf16.msra.mxu0 %v277
  %333 = vmatprep.subr.bf16.mxu0 0
  %334 = vmatpush1.bf16.msra.mxu0 0
  %335 = vmatprep.subr.bf16.mxu0 0
  %336 = vmatpush1.bf16.msra.mxu0 0
  %337 = vmatprep.subr.bf16.mxu0 0
  %338 = vmatpush1.bf16.msra.mxu0 0
  %339 = vmatprep.subr.bf16.mxu0 0
  %340 = vmatpush1.bf16.msra.mxu0 0
  %341 = vmatprep.subr.bf16.mxu0 0
  %342 = vmatpush1.bf16.msra.mxu0 0
  %343 = vmatprep.subr.bf16.mxu0 0
  %344 = vmatpush1.bf16.msra.mxu0 0
  %345 = vmatprep.subr.bf16.mxu0 0
  %346 = vmatpush1.bf16.msra.mxu0 0
  %347 = vmatprep.subr.bf16.mxu0 0
  %348 = vmatpush1.bf16.msra.mxu0 0
  %349 = vmatprep.subr.bf16.mxu0 0
  %350 = vmatpush1.bf16.msra.mxu0 0
  %351 = vmatprep.subr.bf16.mxu0 0
  %352 = vmatpush1.bf16.msra.mxu0 0
  %353 = vmatprep.subr.bf16.mxu0 0
  %354 = vmatpush1.bf16.msra.mxu0 0
  %355 = vmatprep.mubr.bf16.mxu0 0
  %356 = vmatmul.mubr.bf16.gmra.mrb[0].mxu0 %v267
  %v357 = vpop.f32.mrb[0].mxu0
  %v358 = vadd.f32 %v263, %v357
  %v359 = vpop.f32.mrb[0].mxu0
  %v360 = vadd.f32 %v263, %v359
  %v361 = vpop.f32.mrb[0].mxu0
  %v362 = vpop.f32.mrb[0].mxu0
  %363 = vdwg.mxu0
  %vm364 = vcmp.gt.f32.partialorder %v317, 0.0
  %vm365 = vcmp.gt.f32.partialorder %v319, 0.0
  %vm366 = vcmp.gt.f32.partialorder %v358, 0.0
  %vm367 = vcmp.gt.f32.partialorder %v360, 0.0
  %v368 = vmul.f32 %v317, 0.2
  %v369 = vmul.f32 %v319, 0.2
  %v370 = vmul.f32 %v358, 0.2
  %v371 = vmul.f32 %v360, 0.2
  %v372 = vsel %vm364, %v317, %v368
  %v373 = vsel %vm365, %v319, %v369
  %v374 = vsel %vm366, %v358, %v370
  %v375 = vsel %vm367, %v360, %v371
  %376 = vst [vmem:[%s3] sm:$0xff] %v372
  %377 = vst [vmem:[%s3 + $0x8] sm:$0xff] %v373
  %378 = vst [vmem:[%s3 + $0x10] sm:$0xff] %v374
  %379 = vst [vmem:[%s3 + $0x18] sm:$0xff] %v375
  // Predicated region
  $region14: #{conv_lrelu_2.1} parent=0 // pred_check
    _
  $region15: #{conv_lrelu_2.1} parent=0 // pred_check_branch
    %381 = sbr.rel (0) target = $region17
  $region16: #{conv_lrelu_2.1} parent=0 // pred_region
    _
  $region17: #{conv_lrelu_2.1} parent=0 // pred_fallthru
    _
  // Predicated region
  $region18: #{conv_lrelu_2.1} parent=0 // pred_check
    _
  $region19: #{conv_lrelu_2.1} parent=0 // pred_check_branch
    %383 = sbr.rel (0) target = $region21
  $region20: #{conv_lrelu_2.1} parent=0 // pred_region
    _
  $region21: #{conv_lrelu_2.1} parent=0 // pred_fallthru
    _

</llo_original>
